<compile_context>
chip_gen: v6e
topology: v6e:2x2x1
jax: 0.10.0
libtpu: 0.0.40
codegen_flags: <defaults>
</compile_context>

<pallas_src>
import functools
import math

import jax
import jax.numpy as jnp
from jax.experimental import pallas as pl
from jax.experimental.pallas import tpu as pltpu


_LANE = 128         # lane width; HW tiles are multiples of this when tiling
_SUBLANE_PAD = 8    # zero halo around the pooled column (>= k//2)


# --------------------------------------------------------------------------- #
# Kernel bodies
# --------------------------------------------------------------------------- #
def _channel_attention(w_ref, ext_ref, k, c):
    """sigmoid(Conv1d_k(pooled)) from a zero-extended pooled column.

    ext_ref : (c + 2*_SUBLANE_PAD, 1) f32; rows [_SUBLANE_PAD, _SUBLANE_PAD+c)
              hold the per-channel spatial means, the halo rows are zero
              (== Conv1d zero padding).
    w_ref   : (k,) f32 conv taps in SMEM.
    """
    pad = k // 2
    base = _SUBLANE_PAD - pad
    conv = w_ref[0] * ext_ref[pl.ds(base, c), :]
    for j in range(1, k):
        conv = conv + w_ref[j] * ext_ref[pl.ds(base + j, c), :]
    return jax.nn.sigmoid(conv)                                  # (c, 1) f32


def _eca_fused_kernel(w_ref, x_ref, o_ref, col_ref, attn_ref,
                      *, k, c, inv_hw, hw_tile):
    """Fused path: x resident in VMEM; pool+conv+sigmoid once per image at
    j == 0, then scale/write lane-dense output tile j (read x once, write once).
    x_ref : (c, hw) resident block; o_ref : (c, hw_tile) output tile."""
    j = pl.program_id(1)

    @pl.when(j == 0)
    def _():
        col_ref[...] = jnp.zeros_like(col_ref)
        col_ref[pl.ds(_SUBLANE_PAD, c), :] = (
            jnp.sum(x_ref[...], axis=-1, keepdims=True, dtype=jnp.float32)
            * inv_hw)
        attn_ref[...] = _channel_attention(w_ref, col_ref, k, c)

    if hw_tile == x_ref.shape[-1]:
        x_tile = x_ref[...]
    else:
        start = pl.multiple_of(j * hw_tile, hw_tile)
        x_tile = x_ref[:, pl.ds(start, hw_tile)]
    # Multiply in f32 (attn is f32), cast the product once.
    o_ref[...] = (attn_ref[...] * x_tile).astype(o_ref.dtype)


def _eca_pool_kernel(w_ref, x_ref, attn_ref, acc_ref, *, k, c, hw, hw_tile,
                     inv_hw):
    """Split path, pass 1: HW-tiled pool reduction (masked edge tile), then
    conv + sigmoid on the last tile."""
    j = pl.program_id(1)

    @pl.when(j == 0)
    def _():
        acc_ref[...] = jnp.zeros_like(acc_ref)

    xv = x_ref[...]
    if hw % hw_tile != 0:
        # Edge tile: lanes beyond hw hold garbage (Pallas does not zero-fill
        # out-of-bounds reads) - mask them out of the spatial sum.
        lane = jax.lax.broadcasted_iota(jnp.int32, xv.shape, 1)
        in_bounds = (j * hw_tile + lane) < hw
        xv = jnp.where(in_bounds, xv, jnp.zeros_like(xv))
    acc_ref[pl.ds(_SUBLANE_PAD, c), :] += jnp.sum(
        xv, axis=-1, keepdims=True, dtype=jnp.float32)

    @pl.when(j == pl.num_programs(1) - 1)
    def _():
        acc_ref[...] = acc_ref[...] * inv_hw   # sums -> means; halo stays zero
        attn_ref[...] = _channel_attention(w_ref, acc_ref, k, c)


def _eca_scale_kernel(attn_ref, x_ref, o_ref):
    """Split path, pass 2: broadcasted per-channel scaling (f32 multiply,
    single cast); out-of-bounds lanes of the edge tile are dropped on store."""
    o_ref[...] = (attn_ref[...] * x_ref[...]).astype(o_ref.dtype)


# --------------------------------------------------------------------------- #
# Wrapper / tiling heuristics
# --------------------------------------------------------------------------- #
def _round_down(v, m):
    return v // m * m


def _vmem_capacity_bytes():
    try:
        return int(pltpu.get_tpu_info().vmem_capacity_bytes)
    except Exception:
        return 64 * 1024 * 1024        # be conservative (v7x-sized) if unknown


def _vmem_limit_bytes(bytes_needed, cap):
    return int(min(max(2 * bytes_needed, 32 * 1024 * 1024),
                   cap - 4 * 1024 * 1024))


def _split_tile(hw, c, itemsize, budget):
    """Largest 128-lane-multiple HW tile under the per-block byte budget.
    No divisibility requirement: the grid uses cdiv + a masked edge tile."""
    if hw < _LANE:
        return hw                       # block == full dim (allowed)
    by_budget = max(_LANE, _round_down(budget // max(c * itemsize, 1), _LANE))
    return max(_LANE, min(_round_down(hw, _LANE), by_budget))


def _fused_out_tile(hw, c, itemsize, budget, max_steps=32):
    """Output tile for the fused path.  Must divide hw exactly (so slicing the
    resident input block is always in bounds) and be a lane multiple; only
    used when the image is large and lane-aligned, otherwise a single full
    block per image keeps per-grid-step overhead minimal."""
    if hw % _LANE != 0 or c * hw * itemsize <= budget:
        return hw
    cands = [d for d in range(_LANE, hw, _LANE)
             if hw % d == 0 and hw // d <= max_steps]
    fitting = [d for d in cands if c * d * itemsize <= budget]
    if fitting:
        return max(fitting)
    return min(cands) if cands else hw


def efficient_channel_attention(x, conv_w, k, *, fused_vmem_budget=None,
                                tile_budget_bytes=None):
    """ECA forward.  x: (N, C, H, W); conv_w: (k,) Conv1d taps (bias-free)."""
    n, c, h, w = x.shape
    hw = h * w
    assert k % 2 == 1 and k // 2 <= _SUBLANE_PAD
    itemsize = jnp.dtype(x.dtype).itemsize
    inv_hw = 1.0 / float(hw)
    conv_w = conv_w.reshape(-1).astype(jnp.float32)

    # Collapsing trailing dims is a free (bitcast) reshape - no HBM pass.
    x_flat = x.reshape(n, c, hw)

    vmem_cap = _vmem_capacity_bytes()
    if tile_budget_bytes is None:
        tile_budget_bytes = (8 * 1024 * 1024 if vmem_cap >= 96 * 1024 * 1024
                             else 4 * 1024 * 1024)
    if fused_vmem_budget is None:
        fused_vmem_budget = max(vmem_cap - 24 * 1024 * 1024, vmem_cap // 2)

    ext_rows = c + 2 * _SUBLANE_PAD
    w_spec = pl.BlockSpec(memory_space=pltpu.MemorySpace.SMEM)

    # Fused footprint: double-buffered resident input + double-buffered output
    # tiles + tiny f32 scratch columns.
    hw_tile_f = _fused_out_tile(hw, c, itemsize, tile_budget_bytes)
    num_hw_f = hw // hw_tile_f
    fused_bytes = (2 * c * hw + 2 * c * hw_tile_f) * itemsize + 8 * ext_rows

    if fused_bytes <= fused_vmem_budget:
        # ---------------- fused single-read / single-write path ------------ #
        out_flat = pl.pallas_call(
            functools.partial(_eca_fused_kernel, k=k, c=c, inv_hw=inv_hw,
                              hw_tile=hw_tile_f),
            out_shape=jax.ShapeDtypeStruct((n, c, hw), x.dtype),
            grid_spec=pltpu.PrefetchScalarGridSpec(
                num_scalar_prefetch=0,
                grid=(n, num_hw_f),
                in_specs=[
                    w_spec,
                    # Input block stays resident across the inner HW axis.
                    pl.BlockSpec((pl.Squeezed(), c, hw), lambda i, j: (i, 0, 0)),
                ],
                out_specs=pl.BlockSpec((pl.Squeezed(), c, hw_tile_f),
                                       lambda i, j: (i, 0, j)),
                scratch_shapes=[pltpu.VMEM((ext_rows, 1), jnp.float32),
                                pltpu.VMEM((c, 1), jnp.float32)],
            ),
            compiler_params=pltpu.CompilerParams(
                dimension_semantics=("parallel", "arbitrary"),
                vmem_limit_bytes=_vmem_limit_bytes(fused_bytes, vmem_cap)),
            cost_estimate=pl.CostEstimate(
                flops=2 * n * c * hw + 2 * n * c * k,
                transcendentals=n * c,
                bytes_accessed=2 * n * c * hw * itemsize),
        )(conv_w, x_flat)
    else:
        # ---------------- split (pool -> scale) path ----------------------- #
        hw_tile_s = _split_tile(hw, c, itemsize, tile_budget_bytes)
        num_hw_s = pl.cdiv(hw, hw_tile_s)

        # Pass 1: global average pool + k-tap channel conv + sigmoid -> (N,C,1).
        attn = pl.pallas_call(
            functools.partial(_eca_pool_kernel, k=k, c=c, hw=hw,
                              hw_tile=hw_tile_s, inv_hw=inv_hw),
            out_shape=jax.ShapeDtypeStruct((n, c, 1), jnp.float32),
            grid_spec=pltpu.PrefetchScalarGridSpec(
                num_scalar_prefetch=0,
                grid=(n, num_hw_s),
                in_specs=[
                    w_spec,
                    pl.BlockSpec((pl.Squeezed(), c, hw_tile_s),
                                 lambda i, j: (i, 0, j)),
                ],
                out_specs=pl.BlockSpec((pl.Squeezed(), c, 1),
                                       lambda i, j: (i, 0, 0)),
                scratch_shapes=[pltpu.VMEM((ext_rows, 1), jnp.float32)],
            ),
            compiler_params=pltpu.CompilerParams(
                dimension_semantics=("parallel", "arbitrary"),
                vmem_limit_bytes=_vmem_limit_bytes(
                    2 * c * hw_tile_s * itemsize, vmem_cap)),
            cost_estimate=pl.CostEstimate(
                flops=n * c * hw + 2 * n * c * k,
                transcendentals=n * c,
                bytes_accessed=n * c * hw * itemsize),
        )(conv_w, x_flat)

        # Pass 2: broadcasted per-channel scaling, fully parallel and tiled.
        out_flat = pl.pallas_call(
            _eca_scale_kernel,
            out_shape=jax.ShapeDtypeStruct((n, c, hw), x.dtype),
            grid_spec=pltpu.PrefetchScalarGridSpec(
                num_scalar_prefetch=0,
                grid=(n, num_hw_s),
                in_specs=[
                    pl.BlockSpec((pl.Squeezed(), c, 1),
                                 lambda i, j: (i, 0, 0)),
                    pl.BlockSpec((pl.Squeezed(), c, hw_tile_s),
                                 lambda i, j: (i, 0, j)),
                ],
                out_specs=pl.BlockSpec((pl.Squeezed(), c, hw_tile_s),
                                       lambda i, j: (i, 0, j)),
            ),
            compiler_params=pltpu.CompilerParams(
                dimension_semantics=("parallel", "parallel"),
                vmem_limit_bytes=_vmem_limit_bytes(
                    4 * c * hw_tile_s * itemsize, vmem_cap)),
            cost_estimate=pl.CostEstimate(
                flops=n * c * hw,
                transcendentals=0,
                bytes_accessed=2 * n * c * hw * itemsize + n * c * 4),
        )(attn, x_flat)

    return out_flat.reshape(n, c, h, w)


# --------------------------------------------------------------------------- #
# Pure-JAX reference + self-test
# --------------------------------------------------------------------------- #
def _eca_reference(x, conv_w, k):
    n, c, h, w = x.shape
    pad = k // 2
    pooled = jnp.mean(x, axis=(2, 3))                    # (N, C)
    padded = jnp.pad(pooled, ((0, 0), (pad, pad)))
    conv = jnp.zeros_like(pooled)
    for j in range(k):
        conv = conv + conv_w[j] * padded[:, j:j + c]
    attn = jax.nn.sigmoid(conv)[:, :, None, None]
    return attn * x


if __name__ == "__main__":
    b, gamma = 1, 2

    def eca_kernel_size(c):
        t = int(abs((math.log(c, 2) + b) / gamma))
        return t if t % 2 else t + 1

    key = jax.random.PRNGKey(0)
    kx1, kx2, kx3, kw = jax.random.split(key, 4)

    k = 3
    bound = 1.0 / math.sqrt(k)
    conv_w = jax.random.uniform(kw, (k,), minval=-bound, maxval=bound,
                                dtype=jnp.float32)

    # Case 1: small, non-lane-aligned HW (64) -> fused path, full blocks,
    # no wrapper padding anywhere.
    N1, C1, H1, W1 = 2, 16, 8, 8
    assert eca_kernel_size(C1) == k
    x1 = jax.random.normal(kx1, (N1, C1, H1, W1), dtype=jnp.float32)
    out1 = jax.block_until_ready(efficient_channel_attention(x1, conv_w, k))
    assert out1.shape == x1.shape
    assert jnp.allclose(out1, _eca_reference(x1, conv_w, k), atol=1e-5, rtol=1e-5)

    # Case 2: force the split (pool -> scale) path with a ragged HW
    # (324 -> 256-wide tiles + masked edge tile).
    N2, C2, H2, W2 = 2, 32, 18, 18
    assert eca_kernel_size(C2) == k
    x2 = jax.random.normal(kx2, (N2, C2, H2, W2), dtype=jnp.float32)
    out2 = jax.block_until_ready(
        efficient_channel_attention(x2, conv_w, k, fused_vmem_budget=0))
    assert out2.shape == x2.shape
    assert jnp.allclose(out2, _eca_reference(x2, conv_w, k), atol=1e-5, rtol=1e-5)

    # Case 3: fused path with lane-aligned HW (512) and a tiny forced tile
    # budget -> resident input block + HW-tiled lane-dense output writes.
    N3, C3, H3, W3 = 1, 8, 16, 32
    assert eca_kernel_size(C3) == k
    x3 = jax.random.normal(kx3, (N3, C3, H3, W3), dtype=jnp.float32)
    out3 = jax.block_until_ready(
        efficient_channel_attention(x3, conv_w, k, tile_budget_bytes=4096))
    assert out3.shape == x3.shape
    assert jnp.allclose(out3, _eca_reference(x3, conv_w, k), atol=1e-5, rtol=1e-5)

    print("KERNEL_OK")
</pallas_src>

<mosaic_0001>
module attributes {stable_mosaic.version = 11 : i64} {
  func.func @_eca_fused_kernel(%arg0: i32, %arg1: i32, %arg2: memref<3xf32, #tpu.memory_space<smem>>, %arg3: memref<1x16x64xf32, #tpu.memory_space<vmem>>, %arg4: memref<1x16x64xf32, #tpu.memory_space<vmem>>, %arg5: memref<32x1xf32, #tpu.memory_space<vmem>>, %arg6: memref<16x1xf32, #tpu.memory_space<vmem>>) attributes {dimension_semantics = [#tpu.dimension_semantics<parallel>, #tpu.dimension_semantics<arbitrary>], iteration_bounds = array<i64: 2, 1>, scalar_prefetch = 0 : i64, scratch_operands = 2 : i64, tpu.core_type = #tpu.core_type<tc>, window_params = [{transform_indices = @transform_0, window_bounds = array<i64: 3>}, {transform_indices = @transform_1, window_bounds = array<i64: 1, 16, 64>}, {transform_indices = @transform_2, window_bounds = array<i64: 1, 16, 64>}]} {
    %c0_i32 = arith.constant 0 : i32
    %0 = arith.cmpi eq, %arg1, %c0_i32 : i32
    %1 = arith.extui %0 : i1 to i32
    %c0_i32_0 = arith.constant 0 : i32
    %2 = arith.cmpi ne, %1, %c0_i32_0 : i32
    scf.if %2 {
      %cst = arith.constant 0.000000e+00 : f32
      %11 = vector.broadcast %cst : f32 to vector<32x1xf32>
      %c0_8 = arith.constant 0 : index
      %c0_9 = arith.constant 0 : index
      %12 = vector.load %arg5[%c0_8, %c0_9] : memref<32x1xf32, #tpu.memory_space<vmem>>, vector<32x1xf32>
      tpu.vector_store %arg5[%c0_8, %c0_9], %11 {strides = array<i32>} : memref<32x1xf32, #tpu.memory_space<vmem>>, vector<32x1xf32>,
      %c0_10 = arith.constant 0 : index
      %c0_11 = arith.constant 0 : index
      %c0_12 = arith.constant 0 : index
      %13 = vector.load %arg3[%c0_10, %c0_11, %c0_12] : memref<1x16x64xf32, #tpu.memory_space<vmem>>, vector<1x16x64xf32>
      %14 = vector.shape_cast %13 : vector<1x16x64xf32> to vector<16x64xf32>
      %cst_13 = arith.constant dense<0.000000e+00> : vector<16xf32>
      %15 = vector.multi_reduction <add>, %14, %cst_13 [1] : vector<16x64xf32> to vector<16xf32>
      %16 = vector.shape_cast %15 : vector<16xf32> to vector<16x1xf32>
      %cst_14 = arith.constant 1.562500e-02 : f32
      %17 = vector.broadcast %cst_14 : f32 to vector<16x1xf32>
      %18 = arith.mulf %16, %17 : vector<16x1xf32>
      %c8 = arith.constant 8 : index
      %c0_15 = arith.constant 0 : index
      %19 = vector.load %arg5[%c8, %c0_15] : memref<32x1xf32, #tpu.memory_space<vmem>>, vector<16x1xf32>
      tpu.vector_store %arg5[%c8, %c0_15], %18 {strides = array<i32>} : memref<32x1xf32, #tpu.memory_space<vmem>>, vector<16x1xf32>,
      %c0_16 = arith.constant 0 : index
      %20 = memref.load %arg2[%c0_16] : memref<3xf32, #tpu.memory_space<smem>>
      %c7 = arith.constant 7 : index
      %c0_17 = arith.constant 0 : index
      %21 = vector.load %arg5[%c7, %c0_17] : memref<32x1xf32, #tpu.memory_space<vmem>>, vector<16x1xf32>
      %22 = vector.broadcast %20 : f32 to vector<16x1xf32>
      %23 = arith.mulf %22, %21 : vector<16x1xf32>
      %c1 = arith.constant 1 : index
      %24 = memref.load %arg2[%c1] : memref<3xf32, #tpu.memory_space<smem>>
      %c8_18 = arith.constant 8 : index
      %c0_19 = arith.constant 0 : index
      %25 = vector.load %arg5[%c8_18, %c0_19] : memref<32x1xf32, #tpu.memory_space<vmem>>, vector<16x1xf32>
      %26 = vector.broadcast %24 : f32 to vector<16x1xf32>
      %27 = arith.mulf %26, %25 : vector<16x1xf32>
      %28 = arith.addf %23, %27 : vector<16x1xf32>
      %c2 = arith.constant 2 : index
      %29 = memref.load %arg2[%c2] : memref<3xf32, #tpu.memory_space<smem>>
      %c9 = arith.constant 9 : index
      %c0_20 = arith.constant 0 : index
      %30 = vector.load %arg5[%c9, %c0_20] : memref<32x1xf32, #tpu.memory_space<vmem>>, vector<16x1xf32>
      %31 = vector.broadcast %29 : f32 to vector<16x1xf32>
      %32 = arith.mulf %31, %30 : vector<16x1xf32>
      %33 = arith.addf %28, %32 : vector<16x1xf32>
      %34 = arith.negf %33 : vector<16x1xf32>
      %35 = math.exp %34 : vector<16x1xf32>
      %cst_21 = arith.constant 1.000000e+00 : f32
      %36 = vector.broadcast %cst_21 : f32 to vector<16x1xf32>
      %37 = arith.addf %36, %35 : vector<16x1xf32>
      %38 = arith.divf %36, %37 : vector<16x1xf32>
      %c0_22 = arith.constant 0 : index
      %c0_23 = arith.constant 0 : index
      %39 = vector.load %arg6[%c0_22, %c0_23] : memref<16x1xf32, #tpu.memory_space<vmem>>, vector<16x1xf32>
      tpu.vector_store %arg6[%c0_22, %c0_23], %38 {strides = array<i32>} : memref<16x1xf32, #tpu.memory_space<vmem>>, vector<16x1xf32>,
    } else {
    }
    %c0 = arith.constant 0 : index
    %c0_1 = arith.constant 0 : index
    %c0_2 = arith.constant 0 : index
    %3 = vector.load %arg3[%c0, %c0_1, %c0_2] : memref<1x16x64xf32, #tpu.memory_space<vmem>>, vector<1x16x64xf32>
    %4 = vector.shape_cast %3 : vector<1x16x64xf32> to vector<16x64xf32>
    %c0_3 = arith.constant 0 : index
    %c0_4 = arith.constant 0 : index
    %5 = vector.load %arg6[%c0_3, %c0_4] : memref<16x1xf32, #tpu.memory_space<vmem>>, vector<16x1xf32>
    %6 = vector.broadcast %5 : vector<16x1xf32> to vector<16x64xf32>
    %7 = arith.mulf %6, %4 : vector<16x64xf32>
    %c0_5 = arith.constant 0 : index
    %c0_6 = arith.constant 0 : index
    %c0_7 = arith.constant 0 : index
    %8 = vector.load %arg4[%c0_5, %c0_6, %c0_7] : memref<1x16x64xf32, #tpu.memory_space<vmem>>, vector<1x16x64xf32>
    %9 = vector.shape_cast %8 : vector<1x16x64xf32> to vector<16x64xf32>
    %10 = vector.shape_cast %7 : vector<16x64xf32> to vector<1x16x64xf32>
    tpu.vector_store %arg4[%c0_5, %c0_6, %c0_7], %10 {strides = array<i32>} : memref<1x16x64xf32, #tpu.memory_space<vmem>>, vector<1x16x64xf32>,
    return
  }
  func.func @transform_0(%arg0: i32, %arg1: i32) -> i32 {
    %c0_i32 = arith.constant 0 : i32
    %c0_i32_0 = arith.constant 0 : i32
    return %c0_i32 : i32
  }
  func.func @transform_1(%arg0: i32, %arg1: i32) -> (i32, i32, i32) {
    %c0_i32 = arith.constant 0 : i32
    %c0_i32_0 = arith.constant 0 : i32
    %c0_i32_1 = arith.constant 0 : i32
    return %arg0, %c0_i32, %c0_i32_0 : i32, i32, i32
  }
  func.func @transform_2(%arg0: i32, %arg1: i32) -> (i32, i32, i32) {
    %c0_i32 = arith.constant 0 : i32
    %c0_i32_0 = arith.constant 0 : i32
    return %arg0, %c0_i32, %arg1 : i32, i32, i32
  }
}

</mosaic_0001>

<llo_original>
// kernel: tpu_custom_call.1
$region0: #{tpu_custom_call.1}
  #allocation0 [shape = 'u32[]', space=smem, size = 0x4, offset = 0x4, fixed_abs, tag = 'smem constant byte address 0x4 - core index']
  #allocation1 [shape = 'u32[144,128]{1,0:T(1,128)}', space=vmem, size = 0x12000, scoped, tag = 'internal scratch']
  #allocation2 [shape = 'f32[32,1]{1,0:T(8,128)}', space=vmem, size = 0x4000, scoped, tag = 'scratch operand']
  #allocation3 [shape = 'f32[16,1]{1,0:T(8,128)}', space=vmem, size = 0x2000, scoped, tag = 'scratch operand']
  %s0 = inlined_call_operand.hbm [shape: f32[3], index: 0, kind: input, shape index: {}]
  %s1 = inlined_call_operand.hbm [shape: f32[2,16,64], index: 1, kind: input, shape index: {}]
  %s2 = inlined_call_operand.hbm [shape: f32[2,16,64], index: 2, kind: output, shape index: {}]
  %s3 = sld [smem:[#allocation0]]
  $region53: #{tpu_custom_call.1} parent=0
    _
  %s5 = ssub.s32 1, %s3
  %s6 = scalar_select 0, %s5, %s3
  $region1: #{tpu_custom_call.1} parent=0
    #allocation4 [shape = 'u8[512]{0}', space=smem, size = 0x200, scoped, tag = 'input window, operand 0, single buffered']
    #allocation5 [shape = 's32[2]{0}', space=sflag, size = 0x8, scoped, tag = 'scoped memory for tpu_custom_call.1']
    #allocation6 [shape = 's32[2]{0}', space=sflag, size = 0x8, scoped, tag = 'scoped memory for tpu_custom_call.1']
    #allocation7 [shape = 's32[2]{0}', space=sflag, size = 0x8, scoped, tag = 'scoped memory for tpu_custom_call.1']
    #allocation8 [shape = 'u8[16384]{0}', space=vmem, size = 0x4000, scoped, tag = 'input window, operand 1']
    #allocation9 [shape = 'u8[16384]{0}', space=vmem, size = 0x4000, scoped, tag = 'output window, operand 0']
    %7 = vsyncpa [#allocation7], 0
    %8 = vsyncpa [#allocation5], 0
    %s9 = scalar_lea.sflag [#allocation5], 1
    %10 = vsyncpa %s9, 0
    %11 = vsyncpa [#allocation6], 0
    %s12 = scalar_lea.sflag [#allocation6], 1
    %13 = vsyncpa %s12, 0
    loop: start=0, step=1, limit=4
    $region2: #{tpu_custom_call.1} parent=1 // loop_pre_header
      _
    $region3: #{tpu_custom_call.1} parent=1 // loop_header
      %s15 = sphi 0, %s19
      %p16 = scmp.ge.s32.totalorder %s15, 4
      %s22 = sphi 0, %s34
      %s23 = sphi 0, %s30
      %s24 = sphi 0, %s22
      %s25 = sphi 0, %s23
      %s26 = sphi 0, %s24
      %s27 = sphi 0, %s25
      %s35 = sphi 0, %s35
      %s37 = sphi 0, %s35
      %s38 = sphi 0, %s37
      %s52 = sphi 0, %s38
      %s58 = sphi 0, %s60
      %s61 = sphi 0, %s58
      %s62 = sphi 0, %s61
      %s78 = sphi 0, %s62
      %s86 = sphi 0, %s88
      %s89 = sphi 0, %s86
      %s90 = sphi 0, %s89
      %s106 = sphi 0, %s90
    $region4: #{tpu_custom_call.1} parent=1 // loop_header_branch
      %18 = sbr.rel (%p16) target = $region8
    $region5: #{tpu_custom_call.1} parent=1 // loop_body
      %s20 = ssub.s32 %s15, 1
      %s21 = ssub.s32 %s15, 2
      %s28 = sadd.s32 1, %s23
      %p29 = scmp.ge.s32.totalorder %s28, 1
      %s30 = scalar_select %p29, 0, %s28
      %s31 = sadd.s32 1, %s22
      %s32 = scalar_select %p29, %s31, %s22
      %p33 = scmp.ge.s32.totalorder %s32, 2
      %s34 = scalar_select %p33, 0, %s32
      %s36 = sadd.s32 %s35, 1
      %p39 = scmp.eq.s32.totalorder %s15, 1
      %p40 = scmp.ne.s32.totalorder %s35, %s37
      %p41 = scmp.eq.s32.totalorder %s15, 0
      %p42 = por %p40, %p41
      %p43 = scmp.ne.s32.totalorder %s35, %s37
      %p44 = scmp.eq.s32.totalorder %s20, 1
      %p45 = por %p43, %p44
      %p46 = scmp.ne.s32.totalorder %s37, %s38
      %p47 = scmp.eq.s32.totalorder %s20, 0
      %p48 = por %p46, %p47
      %p49 = scmp.ne.s32.totalorder %s37, %s38
      %p50 = scmp.eq.s32.totalorder %s21, 1
      %p51 = por %p49, %p50
      %p53 = scmp.ne.s32.totalorder %s38, %s52
      %p54 = scmp.eq.s32.totalorder %s21, 0
      %p55 = por %p53, %p54
      %s56 = ssub.s32 %s22, %s34
      %p57 = scmp.eq.s32.totalorder %s56, 0
      %s59 = sadd.s32 %s58, 1
      %s60 = scalar_select %p57, %s58, %s59
      %p63 = pneg %p57
      %p64 = scmp.eq.s32.totalorder %s15, 1
      %p65 = por %p63, %p64
      %p66 = scmp.ne.s32.totalorder %s58, %s61
      %p67 = scmp.eq.s32.totalorder %s15, 0
      %p68 = por %p66, %p67
      %p69 = scmp.ne.s32.totalorder %s58, %s61
      %p70 = scmp.eq.s32.totalorder %s20, 1
      %p71 = por %p69, %p70
      %p72 = scmp.ne.s32.totalorder %s61, %s62
      %p73 = scmp.eq.s32.totalorder %s20, 0
      %p74 = por %p72, %p73
      %p75 = scmp.ne.s32.totalorder %s61, %s62
      %p76 = scmp.eq.s32.totalorder %s21, 1
      %p77 = por %p75, %p76
      %p79 = scmp.ne.s32.totalorder %s62, %s78
      %p80 = scmp.eq.s32.totalorder %s21, 0
      %p81 = por %p79, %p80
      %s82 = ssub.s32 %s22, %s34
      %s83 = ssub.s32 %s23, %s30
      %s84 = sor.u32 %s82, %s83
      %p85 = scmp.eq.s32.totalorder %s84, 0
      %s87 = sadd.s32 %s86, 1
      %s88 = scalar_select %p85, %s86, %s87
      %p91 = pneg %p85
      %p92 = scmp.eq.s32.totalorder %s15, 1
      %p93 = por %p91, %p92
      %p94 = scmp.ne.s32.totalorder %s86, %s89
      %p95 = scmp.eq.s32.totalorder %s15, 0
      %p96 = por %p94, %p95
      %p97 = scmp.ne.s32.totalorder %s86, %s89
      %p98 = scmp.eq.s32.totalorder %s20, 1
      %p99 = por %p97, %p98
      %p100 = scmp.ne.s32.totalorder %s89, %s90
      %p101 = scmp.eq.s32.totalorder %s20, 0
      %p102 = por %p100, %p101
      %p103 = scmp.ne.s32.totalorder %s89, %s90
      %p104 = scmp.eq.s32.totalorder %s21, 1
      %p105 = por %p103, %p104
      %p107 = scmp.ne.s32.totalorder %s90, %s106
      %p108 = scmp.eq.s32.totalorder %s21, 0
      %p109 = por %p107, %p108
      %p110 = scmp.le.s32.totalorder 1, %s15
      %p111 = scmp.lt.s32.totalorder %s15, 3
      %p112 = pnand %p110, %p111
      %p113 = pneg %p112
      // Predicated region
      $region9: #{tpu_custom_call.1} parent=5 // pred_check
        _
      $region10: #{tpu_custom_call.1} parent=5 // pred_check_branch
        %115 = sbr.rel (%p112) target = $region12
      $region11: #{tpu_custom_call.1} parent=5 // pred_region
        %s116 = ssub.s32 %s15, 1
        // Predicated region
        $region13: #{tpu_custom_call.1} parent=11 // pred_check
          %p117 = pneg %p48
        $region14: #{tpu_custom_call.1} parent=11 // pred_check_branch
          %119 = sbr.rel (%p117) target = $region16
        $region15: #{tpu_custom_call.1} parent=11 // pred_region
          %s121 = ssub.s32 16, 16
          %122 = vsyncadd [#allocation7], %s121
          %125 = dma.hbm_to_smem %s0, 16, [#allocation4], [#allocation7]
        $region16: #{tpu_custom_call.1} parent=11 // pred_fallthru
          _
      $region12: #{tpu_custom_call.1} parent=5 // pred_fallthru
        _
      %p126 = scmp.lt.s32.totalorder %s15, 2
      // Predicated region
      $region17: #{tpu_custom_call.1} parent=5 // pred_check
        %p127 = pneg %p126
      $region18: #{tpu_custom_call.1} parent=5 // pred_check_branch
        %129 = sbr.rel (%p127) target = $region20
      $region19: #{tpu_custom_call.1} parent=5 // pred_region
        // Predicated region
        $region21: #{tpu_custom_call.1} parent=19 // pred_check
          %p130 = pneg %p68
        $region22: #{tpu_custom_call.1} parent=19 // pred_check_branch
          %132 = sbr.rel (%p130) target = $region24
        $region23: #{tpu_custom_call.1} parent=19 // pred_region
          %s133 = sand.u32 %s58, 1
          %s134 = scalar_lea.sflag [#allocation5], %s133
          %s135 = sand.u32 %s58, 1
          %s136 = smul.addr %s135, 16
          %s137 = scalar_lea.vmem [#allocation8], %s136
          %s139 = ssub.s32 256, 256
          %140 = vsyncadd %s134, %s139
          %s141 = smul.addr %s22, 2
          %s142 = smul.addr %s141, 128
          %s143 = scalar_lea.hbm %s1, %s142
          %s144 = sshll.u32 %s137, 4
          %s145 = int_to_ptr.vmem [resolvable:$true] %s144
          %150 = dma.hbm_to_vmem [thread:$0]  %s143, 256, %s145, %s134, 128, 128, 8
        $region24: #{tpu_custom_call.1} parent=19 // pred_fallthru
          _
      $region20: #{tpu_custom_call.1} parent=5 // pred_fallthru
        _
      %p151 = scmp.le.s32.totalorder 1, %s15
      %p152 = scmp.lt.s32.totalorder %s15, 3
      %p153 = pnand %p151, %p152
      %p154 = pneg %p153
      // Predicated region
      $region25: #{tpu_custom_call.1} parent=5 // pred_check
        _
      $region26: #{tpu_custom_call.1} parent=5 // pred_check_branch
        %156 = sbr.rel (%p153) target = $region28
      $region27: #{tpu_custom_call.1} parent=5 // pred_region
        %s157 = ssub.s32 %s15, 1
        // Predicated region
        $region29: #{tpu_custom_call.1} parent=27 // pred_check
          %p158 = pneg %p48
        $region30: #{tpu_custom_call.1} parent=27 // pred_check_branch
          %160 = sbr.rel (%p158) target = $region32
        $region31: #{tpu_custom_call.1} parent=27 // pred_region
          %161 = dma.done [#allocation7], 16
        $region32: #{tpu_custom_call.1} parent=27 // pred_fallthru
          _
        %s162 = sand.u32 %s61, 1
        %s163 = scalar_lea.sflag [#allocation5], %s162
        %s164 = sand.u32 %s61, 1
        %s165 = smul.addr %s164, 16
        %s166 = scalar_lea.vmem [#allocation8], %s165
        // Predicated region
        $region33: #{tpu_custom_call.1} parent=27 // pred_check
          %p167 = pneg %p74
        $region34: #{tpu_custom_call.1} parent=27 // pred_check_branch
          %169 = sbr.rel (%p167) target = $region36
        $region35: #{tpu_custom_call.1} parent=27 // pred_region
          %170 = dma.done %s163, 256
        $region36: #{tpu_custom_call.1} parent=27 // pred_fallthru
          _
        %171 = sfence
        %p172 = pneg %p48
        %p173 = pneg %p45
        %s174 = sand.u32 %s61, 1
        %s175 = scalar_lea.sflag [#allocation5], %s174
        %s176 = sand.u32 %s61, 1
        %s177 = smul.addr %s176, 16
        %s178 = scalar_lea.vmem [#allocation8], %s177
        %p179 = pneg %p74
        %p180 = pneg %p71
        %p181 = pneg %p102
        %p182 = pneg %p99
        %s183 = sand.u32 %s89, 1
        %s184 = scalar_lea.sflag [#allocation6], %s183
        %s185 = sand.u32 %s89, 1
        %s186 = smul.addr %s185, 16
        %s187 = scalar_lea.vmem [#allocation9], %s186
        %p188 = scmp.eq.s32.totalorder %s25, 0
        // Predicated region
        $region37: #{tpu_custom_call.1} parent=27 // pred_check
          %p189 = pneg %p188
        $region38: #{tpu_custom_call.1} parent=27 // pred_check_branch
          %191 = sbr.rel (%p189) target = $region40
        $region39: #{tpu_custom_call.1} parent=27 // pred_region
          %vm192 = vcmask 7168
          %193 = vst.msk [vmem:[#allocation2] sm:$0xff] %vm192, 0.0
          %194 = vst.msk [vmem:[#allocation2 + $0x8] sm:$0xff] %vm192, 0.0
          %195 = vst.msk [vmem:[#allocation2 + $0x10] sm:$0xff] %vm192, 0.0
          %196 = vst.msk [vmem:[#allocation2 + $0x18] sm:$0xff] %vm192, 0.0
          %v197 = vld [vmem:[%s166] sm:$0xff]
          %v198 = vld [vmem:[%s166 + $0x8] sm:$0xff]
          %vm199 = vcmask 523264
          %v200 = vsel %vm199, %v197, 0.0
          %201 = vadd.xlane.f32.xlu0 %v200
          %v202 = vpop.xlane.xlu0 %201
          %v203 = vsel %vm199, %v198, 0.0
          %204 = vadd.xlane.f32.xlu0 %v203
          %v205 = vpop.xlane.xlu0 %204
          %v206 = vmul.f32 %v202, 0.015625
          %v207 = vmul.f32 %v205, 0.015625
          %208 = vst.msk [vmem:[#allocation2 + $0x8] sm:$0xff] %vm192, %v206
          %209 = vst.msk [vmem:[#allocation2 + $0x10] sm:$0xff] %vm192, %v207
          %s210 = sld [smem:[#allocation4]]
          %v211 = vld [vmem:[#allocation2 + $0x7] sm:$0xff]
          %v212 = vld [vmem:[#allocation2 + $0xf] sm:$0xff]
          %v213 = vstv %s210
          %v214 = vmul.f32 %v213, %v211
          %v215 = vmul.f32 %v213, %v212
          %s216 = sld [smem:[#allocation4 + $0x1]]
          %v217 = vld [vmem:[#allocation2 + $0x8] sm:$0xff]
          %v218 = vld [vmem:[#allocation2 + $0x10] sm:$0xff]
          %v219 = vstv %s216
          %v220 = vmul.f32 %v219, %v217
          %v221 = vmul.f32 %v219, %v218
          %v222 = vadd.f32 %v214, %v220
          %v223 = vadd.f32 %v215, %v221
          %s224 = sld [smem:[#allocation4 + $0x2]]
          %v225 = vld [vmem:[#allocation2 + $0x9] sm:$0xff]
          %v226 = vld [vmem:[#allocation2 + $0x11] sm:$0xff]
          %v227 = vstv %s224
          %v228 = vmul.f32 %v227, %v225
          %v229 = vmul.f32 %v227, %v226
          %v230 = vadd.f32 %v222, %v228
          %v231 = vadd.f32 %v223, %v229
          %v232 = vxor.u32 %v230, 2147483648
          %v233 = vxor.u32 %v231, 2147483648
          %v234 = vmul.f32 %v232, 1.442695
          %v235 = vpow.pop %v234
          %v236 = vmul.f32 %v233, 1.442695
          %v237 = vpow.pop %v236
          %v238 = vadd.f32 %v235, 1.0
          %v239 = vadd.f32 %v237, 1.0
          %v240 = vrcp.pop %v238
          %v241 = vmul.f32 1.0, %v240
          %v242 = vrcp.pop %v239
          %v243 = vmul.f32 1.0, %v242
          %244 = vst.msk [vmem:[#allocation3] sm:$0xff] %vm192, %v241
          %245 = vst.msk [vmem:[#allocation3 + $0x8] sm:$0xff] %vm192, %v243
        $region40: #{tpu_custom_call.1} parent=27 // pred_fallthru
          _
        %v246 = vld [vmem:[%s166] sm:$0xff]
        %v247 = vld [vmem:[%s166 + $0x8] sm:$0xff]
        %v248 = vld [vmem:[#allocation3] sm:$0xff]
        %v249 = vld [vmem:[#allocation3 + $0x8] sm:$0xff]
        %251 = vset.pattern.permute.xlu0 0
        %252 = vperm.xlu0 %251, %v248
        %v253 = vpop.permute.xlu0 %252
        %256 = vset.pattern.permute.xlu0 0
        %257 = vperm.xlu0 %256, %v249
        %v258 = vpop.permute.xlu0 %257
        %v260 = vmul.f32 %v253, %v246
        %v261 = vmul.f32 %v258, %v247
        %vm262 = vcmask 523264
        %263 = vst.msk [vmem:[%s187] sm:$0xff] %vm262, %v260
        %264 = vst.msk [vmem:[%s187 + $0x8] sm:$0xff] %vm262, %v261
        %s265 = sand.u32 %s89, 1
        %s266 = scalar_lea.sflag [#allocation6], %s265
        %s267 = sand.u32 %s89, 1
        %s268 = smul.addr %s267, 16
        %s269 = scalar_lea.vmem [#allocation9], %s268
        // Predicated region
        $region41: #{tpu_custom_call.1} parent=27 // pred_check
          %p270 = pneg %p99
        $region42: #{tpu_custom_call.1} parent=27 // pred_check_branch
          %272 = sbr.rel (%p270) target = $region44
        $region43: #{tpu_custom_call.1} parent=27 // pred_region
          %s274 = ssub.s32 256, 256
          %275 = vsyncadd %s266, %s274
          %s276 = smul.addr %s24, 2
          %s277 = sadd.s32 %s25, %s276
          %s278 = smul.addr %s277, 128
          %s279 = scalar_lea.hbm %s2, %s278
          %s280 = sshll.u32 %s269, 4
          %s281 = int_to_ptr.vmem [resolvable:$true] %s280
          %286 = dma.vmem_to_hbm [thread:$0]  %s281, 256, %s279, %s266, 128, 128, 8
        $region44: #{tpu_custom_call.1} parent=27 // pred_fallthru
          _
      $region28: #{tpu_custom_call.1} parent=5 // pred_fallthru
        _
      %p287 = scmp.le.s32.totalorder 2, %s15
      // Predicated region
      $region45: #{tpu_custom_call.1} parent=5 // pred_check
        %p288 = pneg %p287
      $region46: #{tpu_custom_call.1} parent=5 // pred_check_branch
        %290 = sbr.rel (%p288) target = $region48
      $region47: #{tpu_custom_call.1} parent=5 // pred_region
        %s291 = ssub.s32 %s15, 2
        // Predicated region
        $region49: #{tpu_custom_call.1} parent=47 // pred_check
          %p292 = pneg %p105
        $region50: #{tpu_custom_call.1} parent=47 // pred_check_branch
          %294 = sbr.rel (%p292) target = $region52
        $region51: #{tpu_custom_call.1} parent=47 // pred_region
          %s295 = sand.u32 %s90, 1
          %s296 = scalar_lea.sflag [#allocation6], %s295
          %s297 = sand.u32 %s90, 1
          %s298 = smul.addr %s297, 16
          %s299 = scalar_lea.vmem [#allocation9], %s298
          %300 = dma.done %s296, 256
        $region52: #{tpu_custom_call.1} parent=47 // pred_fallthru
          _
      $region48: #{tpu_custom_call.1} parent=5 // pred_fallthru
        _
    $region6: #{tpu_custom_call.1} parent=1 // loop_footer
      %s19 = sadd.s32 1, %s15
    $region7: #{tpu_custom_call.1} parent=1 // loop_footer_branch
      %14 = sbr.rel target = $region3
    $region8: #{tpu_custom_call.1} parent=1 // loop_exit
      _
    %301 = vsyncpa [#allocation5], 1
    %s302 = scalar_lea.sflag [#allocation5], 1
    %303 = vsyncpa %s302, 1
    %304 = vsyncpa [#allocation6], 1
    %s305 = scalar_lea.sflag [#allocation6], 1
    %306 = vsyncpa %s305, 1
    %307 = vsyncpa [#allocation7], 1
    %s308 = scalar_lea.sflag [#allocation7], 1
    %309 = vsyncpa %s308, 1

</llo_original>
